<compile_context>
chip_gen: v5e
topology: v5e:2x2
jax: 0.10.0
libtpu: 0.0.40
codegen_flags: <defaults>
</compile_context>

<pallas_src>
import math

import jax
import jax.numpy as jnp
from jax.experimental import pallas as pl
from jax.experimental.pallas import tpu as pltpu


def _round_up(n, m):
    return ((n + m - 1) // m) * m


def _mlp_kernel(x_ref, w1_ref, b1_ref, w2_ref, b2_ref, o_ref):
    # Layer 1 on the MXU: (TB, D) @ (D, H) -> (TB, H), f32 accumulation.
    h = jnp.dot(x_ref[...], w1_ref[...], preferred_element_type=jnp.float32)
    h = jax.nn.sigmoid(h + b1_ref[...].astype(jnp.float32))

    # Layer 2: contract over H with the RHS transposed:
    #   (1, H) . (TB, H)^T -> (1, TB)   (lane-dense output row).
    w2 = w2_ref[...].astype(jnp.float32)
    y = jax.lax.dot_general(
        w2, h,
        dimension_numbers=(((1,), (1,)), ((), ())),
        preferred_element_type=jnp.float32,
    )
    y = y + b2_ref[0, 0]                      # scalar bias from SMEM
    o_ref[...] = jax.nn.sigmoid(y).astype(o_ref.dtype)


def classification_forward(x, w1, b1, w2, b2, *, block_b=512):
    """x: (B, D); w1: (D, H=2D); b1: (H,) or (1,H); w2: (H, 1); b2: scalar-like.

    Weights are stored pre-transposed vs PyTorch, i.e. (in_features, out_features).
    Returns (B, 1) float32.
    """
    B, D = x.shape
    H = w1.shape[1]

    b1 = jnp.asarray(b1, jnp.float32).reshape(1, H)
    w2_row = jnp.asarray(w2).reshape(1, H)          # (H,1) -> (1,H) row
    b2 = jnp.asarray(b2, jnp.float32).reshape(1, 1)

    # Batch tile: multiple of 8 sublanes, capped at block_b.
    TB = _round_up(min(block_b, _round_up(B, 8)), 8)
    B_pad = _round_up(B, TB)
    if B_pad != B:
        x = jnp.pad(x, ((0, B_pad - B), (0, 0)))
    G = B_pad // TB

    # VMEM budget: double-buffered x tile + resident W1 (+ small stuff + hidden).
    est = (2 * TB * D * jnp.dtype(x.dtype).itemsize
           + 2 * D * H * jnp.dtype(w1.dtype).itemsize
           + TB * H * 4
           + 4 * H * 4
           + 4 * TB * 4)
    vmem_limit = int(min(48 << 20, max(32 << 20, int(1.5 * est))))

    out = pl.pallas_call(
        _mlp_kernel,
        out_shape=jax.ShapeDtypeStruct((G, 1, TB), jnp.float32),
        grid=(G,),
        in_specs=[
            pl.BlockSpec((TB, D), lambda i: (i, 0)),            # x: tiled over batch
            pl.BlockSpec((D, H), lambda i: (0, 0)),             # W1: resident
            pl.BlockSpec((1, H), lambda i: (0, 0)),             # b1: resident
            pl.BlockSpec((1, H), lambda i: (0, 0)),             # w2 row: resident
            pl.BlockSpec((1, 1), lambda i: (0, 0),
                         memory_space=pltpu.MemorySpace.SMEM),  # b2: SMEM scalar
        ],
        out_specs=pl.BlockSpec((None, 1, TB), lambda i: (i, 0, 0)),  # lane-dense row
        compiler_params=pltpu.CompilerParams(
            dimension_semantics=("parallel",),
            vmem_limit_bytes=vmem_limit,
        ),
    )(x, w1, b1, w2_row, b2)

    # (G, 1, TB) -> flat batch order -> (B, 1), dropping any padding rows.
    return out.reshape(B_pad, 1)[:B]


def init_params(key, input_dim):
    """Deterministic init mimicking nn.Linear default (uniform +-1/sqrt(fan_in)).

    Weights are stored transposed relative to PyTorch: (in, out)."""
    hidden_dim = 2 * input_dim
    k1, k2, k3, k4 = jax.random.split(key, 4)
    bound1 = 1.0 / math.sqrt(input_dim)
    bound2 = 1.0 / math.sqrt(hidden_dim)
    w1 = jax.random.uniform(k1, (input_dim, hidden_dim), jnp.float32, -bound1, bound1)
    b1 = jax.random.uniform(k2, (1, hidden_dim), jnp.float32, -bound1, bound1)
    w2 = jax.random.uniform(k3, (hidden_dim, 1), jnp.float32, -bound2, bound2)
    b2 = jax.random.uniform(k4, (1, 1), jnp.float32, -bound2, bound2)
    return w1, b1, w2, b2


if __name__ == "__main__":
    key = jax.random.PRNGKey(0)
    kx, kp = jax.random.split(key)

    batch = 32
    input_dim = 16  # stands in for train_data.shape[1]

    x = jax.random.normal(kx, (batch, input_dim), jnp.float32)
    w1, b1, w2, b2 = init_params(kp, input_dim)

    # Single-tile call (whole batch in one grid step).
    out = jax.block_until_ready(classification_forward(x, w1, b1, w2, b2))

    # Multi-tile call to exercise batch tiling / double-buffered pipeline (grid=(4,)).
    out_tiled = jax.block_until_ready(
        classification_forward(x, w1, b1, w2, b2, block_b=8))

    # Pure-JAX reference check.
    ref = jax.nn.sigmoid(jax.nn.sigmoid(x @ w1 + b1) @ w2 + b2)
    assert out.shape == (batch, 1)
    assert jnp.allclose(out, ref, atol=1e-5, rtol=1e-5)
    assert jnp.allclose(out_tiled, ref, atol=1e-5, rtol=1e-5)

    print("KERNEL_OK")
</pallas_src>

<mosaic_0001>
module attributes {stable_mosaic.version = 11 : i64} {
  func.func @_mlp_kernel(%arg0: i32, %arg1: memref<32x16xf32, #tpu.memory_space<vmem>>, %arg2: memref<16x32xf32, #tpu.memory_space<vmem>>, %arg3: memref<1x32xf32, #tpu.memory_space<vmem>>, %arg4: memref<1x32xf32, #tpu.memory_space<vmem>>, %arg5: memref<1x1xf32, #tpu.memory_space<smem>>, %arg6: memref<1x1x32xf32, #tpu.memory_space<vmem>>) attributes {dimension_semantics = [#tpu.dimension_semantics<parallel>], iteration_bounds = array<i64: 1>, scalar_prefetch = 0 : i64, scratch_operands = 0 : i64, tpu.core_type = #tpu.core_type<tc>, window_params = [{transform_indices = @transform_0, window_bounds = array<i64: 32, 16>}, {pipeline_mode = #tpu.pipeline_mode<synchronous>, transform_indices = @transform_1, window_bounds = array<i64: 16, 32>}, {pipeline_mode = #tpu.pipeline_mode<synchronous>, transform_indices = @transform_2, window_bounds = array<i64: 1, 32>}, {pipeline_mode = #tpu.pipeline_mode<synchronous>, transform_indices = @transform_3, window_bounds = array<i64: 1, 32>}, {transform_indices = @transform_4, window_bounds = array<i64: 1, 1>}, {transform_indices = @transform_5, window_bounds = array<i64: 1, 1, 32>}]} {
    %c0 = arith.constant 0 : index
    %c0_0 = arith.constant 0 : index
    %0 = vector.load %arg1[%c0, %c0_0] : memref<32x16xf32, #tpu.memory_space<vmem>>, vector<32x16xf32>
    %c0_1 = arith.constant 0 : index
    %c0_2 = arith.constant 0 : index
    %1 = vector.load %arg2[%c0_1, %c0_2] : memref<16x32xf32, #tpu.memory_space<vmem>>, vector<16x32xf32>
    %cst = arith.constant dense<0.000000e+00> : vector<32x32xf32>
    %2 = tpu.matmul %0, %1, %cst {dimension_numbers = #tpu.dot_dimension_numbers<[1], [0], [0], [1], [0, 0, 1, 1], [], []>} : vector<32x16xf32>, vector<16x32xf32>, vector<32x32xf32> -> vector<32x32xf32>
    %c0_3 = arith.constant 0 : index
    %c0_4 = arith.constant 0 : index
    %3 = vector.load %arg3[%c0_3, %c0_4] : memref<1x32xf32, #tpu.memory_space<vmem>>, vector<1x32xf32>
    %4 = vector.broadcast %3 : vector<1x32xf32> to vector<32x32xf32>
    %5 = arith.addf %2, %4 : vector<32x32xf32>
    %6 = arith.negf %5 : vector<32x32xf32>
    %7 = math.exp %6 : vector<32x32xf32>
    %cst_5 = arith.constant 1.000000e+00 : f32
    %8 = vector.broadcast %cst_5 : f32 to vector<32x32xf32>
    %9 = arith.addf %8, %7 : vector<32x32xf32>
    %10 = arith.divf %8, %9 : vector<32x32xf32>
    %c0_6 = arith.constant 0 : index
    %c0_7 = arith.constant 0 : index
    %11 = vector.load %arg4[%c0_6, %c0_7] : memref<1x32xf32, #tpu.memory_space<vmem>>, vector<1x32xf32>
    %cst_8 = arith.constant dense<0.000000e+00> : vector<1x32xf32>
    %12 = tpu.matmul %11, %10, %cst_8 {dimension_numbers = #tpu.dot_dimension_numbers<[1], [1], [0], [0], [0, 0, 1, 0], [], []>} : vector<1x32xf32>, vector<32x32xf32>, vector<1x32xf32> -> vector<1x32xf32>
    %c0_9 = arith.constant 0 : index
    %c0_10 = arith.constant 0 : index
    %13 = memref.load %arg5[%c0_9, %c0_10] : memref<1x1xf32, #tpu.memory_space<smem>>
    %14 = vector.broadcast %13 : f32 to vector<1x32xf32>
    %15 = arith.addf %12, %14 : vector<1x32xf32>
    %16 = arith.negf %15 : vector<1x32xf32>
    %17 = math.exp %16 : vector<1x32xf32>
    %cst_11 = arith.constant 1.000000e+00 : f32
    %18 = vector.broadcast %cst_11 : f32 to vector<1x32xf32>
    %19 = arith.addf %18, %17 : vector<1x32xf32>
    %20 = arith.divf %18, %19 : vector<1x32xf32>
    %c0_12 = arith.constant 0 : index
    %c0_13 = arith.constant 0 : index
    %c0_14 = arith.constant 0 : index
    %21 = vector.load %arg6[%c0_12, %c0_13, %c0_14] : memref<1x1x32xf32, #tpu.memory_space<vmem>>, vector<1x1x32xf32>
    %22 = vector.shape_cast %21 : vector<1x1x32xf32> to vector<1x32xf32>
    %23 = vector.shape_cast %20 : vector<1x32xf32> to vector<1x1x32xf32>
    tpu.vector_store %arg6[%c0_12, %c0_13, %c0_14], %23 {strides = array<i32>} : memref<1x1x32xf32, #tpu.memory_space<vmem>>, vector<1x1x32xf32>,
    return
  }
  func.func @transform_0(%arg0: i32) -> (i32, i32) {
    %c0_i32 = arith.constant 0 : i32
    %c0_i32_0 = arith.constant 0 : i32
    return %arg0, %c0_i32 : i32, i32
  }
  func.func @transform_1(%arg0: i32) -> (i32, i32) {
    %c0_i32 = arith.constant 0 : i32
    %c0_i32_0 = arith.constant 0 : i32
    %c0_i32_1 = arith.constant 0 : i32
    return %c0_i32, %c0_i32_0 : i32, i32
  }
  func.func @transform_2(%arg0: i32) -> (i32, i32) {
    %c0_i32 = arith.constant 0 : i32
    %c0_i32_0 = arith.constant 0 : i32
    %c0_i32_1 = arith.constant 0 : i32
    return %c0_i32, %c0_i32_0 : i32, i32
  }
  func.func @transform_3(%arg0: i32) -> (i32, i32) {
    %c0_i32 = arith.constant 0 : i32
    %c0_i32_0 = arith.constant 0 : i32
    %c0_i32_1 = arith.constant 0 : i32
    return %c0_i32, %c0_i32_0 : i32, i32
  }
  func.func @transform_4(%arg0: i32) -> (i32, i32) {
    %c0_i32 = arith.constant 0 : i32
    %c0_i32_0 = arith.constant 0 : i32
    %c0_i32_1 = arith.constant 0 : i32
    return %c0_i32, %c0_i32_0 : i32, i32
  }
  func.func @transform_5(%arg0: i32) -> (i32, i32, i32) {
    %c0_i32 = arith.constant 0 : i32
    %c0_i32_0 = arith.constant 0 : i32
    %c0_i32_1 = arith.constant 0 : i32
    return %arg0, %c0_i32, %c0_i32_0 : i32, i32, i32
  }
}

</mosaic_0001>

<llo_original>
// kernel: tpu_custom_call.1
$region0: #{tpu_custom_call.1}
  #allocation0 [shape = 'u32[]', space=smem, size = 0x4, offset = 0x4, fixed_abs, tag = 'smem constant byte address 0x4 - core index']
  #allocation1 [shape = 'u32[72,128]{1,0:T(1,128)}', space=vmem, size = 0x9000, scoped, tag = 'internal scratch']
  #allocation2 [shape = 'f32[1,1]{1,0:T(1,128)S(6)}', space=smem, size = 0x200, scoped, tag = 'scoped memory for tpu_custom_call.1']
  %s0 = inlined_call_operand.vmem [shape: f32[32,16], index: 0, kind: input, shape index: {}]
  %s1 = inlined_call_operand.vmem [shape: f32[16,32], index: 1, kind: input, shape index: {}]
  %s2 = inlined_call_operand.vmem [shape: f32[1,32], index: 2, kind: input, shape index: {}]
  %s3 = inlined_call_operand.vmem [shape: f32[1,32], index: 3, kind: input, shape index: {}]
  %s4 = inlined_call_operand.<no memory space> [shape: f32[1,1], index: 4, kind: input, shape index: {}]
  %s5 = inlined_call_operand.hbm [shape: f32[1,1,32], index: 5, kind: output, shape index: {}]
  %s6 = sld [smem:[#allocation0]]
  $region30: #{tpu_custom_call.1} parent=0
    _
  %s8 = ssub.s32 1, %s6
  %s9 = scalar_select 0, %s8, %s6
  %10 = sst [smem:[#allocation2]] %s4
  $region1: #{tpu_custom_call.1} parent=0
    #allocation3 [shape = 'u8[512]{0}', space=vmem, size = 0x400, scoped, tag = 'output window, operand 0, single buffered']
    #allocation4 [shape = 's32[1]{0}', space=sflag, size = 0x4, scoped, tag = 'scoped memory for tpu_custom_call.1']
    %11 = vsyncpa [#allocation4], 0
    // Predicated region
    $region2: #{tpu_custom_call.1} parent=1 // pred_check
      _
    $region3: #{tpu_custom_call.1} parent=1 // pred_check_branch
      %13 = sbr.rel (0) target = $region5
    $region4: #{tpu_custom_call.1} parent=1 // pred_region
      _
    $region5: #{tpu_custom_call.1} parent=1 // pred_fallthru
      _
    // Predicated region
    $region6: #{tpu_custom_call.1} parent=1 // pred_check
      _
    $region7: #{tpu_custom_call.1} parent=1 // pred_check_branch
      %15 = sbr.rel (0) target = $region9
    $region8: #{tpu_custom_call.1} parent=1 // pred_region
      _
    $region9: #{tpu_custom_call.1} parent=1 // pred_fallthru
      _
    // Predicated region
    $region10: #{tpu_custom_call.1} parent=1 // pred_check
      _
    $region11: #{tpu_custom_call.1} parent=1 // pred_check_branch
      %17 = sbr.rel (0) target = $region13
    $region12: #{tpu_custom_call.1} parent=1 // pred_region
      _
    $region13: #{tpu_custom_call.1} parent=1 // pred_fallthru
      _
    // Predicated region
    $region14: #{tpu_custom_call.1} parent=1 // pred_check
      _
    $region15: #{tpu_custom_call.1} parent=1 // pred_check_branch
      %19 = sbr.rel (0) target = $region17
    $region16: #{tpu_custom_call.1} parent=1 // pred_region
      _
    $region17: #{tpu_custom_call.1} parent=1 // pred_fallthru
      _
    // Predicated region
    $region18: #{tpu_custom_call.1} parent=1 // pred_check
      _
    $region19: #{tpu_custom_call.1} parent=1 // pred_check_branch
      %21 = sbr.rel (0) target = $region21
    $region20: #{tpu_custom_call.1} parent=1 // pred_region
      _
    $region21: #{tpu_custom_call.1} parent=1 // pred_fallthru
      _
    %v22 = vld [vmem:[%s0] sm:$0xff]
    %v23 = vld [vmem:[%s0 + $0x8] sm:$0xff]
    %v24 = vld [vmem:[%s0 + $0x10] sm:$0xff]
    %v25 = vld [vmem:[%s0 + $0x18] sm:$0xff]
    %v26 = vld [vmem:[%s1] sm:$0xff]
    %v27 = vld [vmem:[%s1 + $0x8] sm:$0xff]
    %v28 = vld [vmem:[%s2] sm:$0x1]
    %v30 = vperm.slane %v28, 0
    %vm32 = vcmask 130048
    %v34 = vsel %vm32, %v22, 0
    %v37 = vsel %vm32, %v23, 0
    %v40 = vsel %vm32, %v24, 0
    %v43 = vsel %vm32, %v25, 0
    %45 = vmatpush.msra.mxu0 0.0
    %46 = vmatpush.msra.mxu0 0.0
    %47 = vmatpush.msra.mxu0 0.0
    %48 = vmatpush.msra.mxu0 0.0
    %49 = vmatpush.msra.mxu0 0.0
    %50 = vmatpush.msra.mxu0 0.0
    %51 = vmatpush.msra.mxu0 0.0
    %52 = vmatpush.msra.mxu0 0.0
    %53 = vmatpush.msra.mxu0 0.0
    %54 = vmatpush.msra.mxu0 0.0
    %55 = vmatpush.msra.mxu0 0.0
    %56 = vmatpush.msra.mxu0 0.0
    %57 = vmatpush.msra.mxu0 0.0
    %58 = vmatpush.msra.mxu0 0.0
    %59 = vmatpush.msra.mxu0 %v27
    %60 = vmatpush.msra.mxu0 %v26
    %61 = vmatmul.f32.gmra.mxu0 %v34
    %v62 = vpop.f32.mrf.mxu0
    %v63 = vadd.f32 %v30, %v62
    %64 = vmatmul.f32.gmra.mxu0 %v37
    %v65 = vpop.f32.mrf.mxu0
    %v66 = vadd.f32 %v30, %v65
    %67 = vmatmul.f32.gmra.mxu0 %v40
    %v68 = vpop.f32.mrf.mxu0
    %v69 = vadd.f32 %v30, %v68
    %70 = vmatmul.f32.gmra.mxu0 %v43
    %v71 = vpop.f32.mrf.mxu0
    %v72 = vadd.f32 %v30, %v71
    %73 = vdwg.mxu0
    %v74 = vxor.u32 %v63, 2147483648
    %v75 = vxor.u32 %v66, 2147483648
    %v76 = vxor.u32 %v69, 2147483648
    %v77 = vxor.u32 %v72, 2147483648
    %v78 = vmul.f32 %v74, 1.442695
    %v79 = vpow.pop %v78
    %v80 = vmul.f32 %v75, 1.442695
    %v81 = vpow.pop %v80
    %v82 = vmul.f32 %v76, 1.442695
    %v83 = vpow.pop %v82
    %v84 = vmul.f32 %v77, 1.442695
    %v85 = vpow.pop %v84
    %v86 = vadd.f32 %v79, 1.0
    %v87 = vadd.f32 %v81, 1.0
    %v88 = vadd.f32 %v83, 1.0
    %v89 = vadd.f32 %v85, 1.0
    %v90 = vrcp.pop %v86
    %v91 = vmul.f32 %v86, %v90
    %v92 = vsub.f32 1.0, %v91
    %v93 = vmul.f32 %v90, %v92
    %v94 = vadd.f32 %v90, %v93
    %vm95 = vweird.f32 %v86
    %vm96 = vweird.f32 %v90
    %vm97 = vmor %vm95, %vm96
    %v98 = vsel %vm97, %v90, %v94
    %v99 = vand.u32 2147483647, %v86
    %vm100 = vcmp.eq.f32.partialorder %v99, 8.507059e+37
    %v101 = vand.u32 %v86, 2147483648
    %v102 = vor.u32 1.1754944e-38, %v101
    %v103 = vsel %vm100, %v102, %v98
    %v104 = vmul.f32 1.0, %v103
    %v105 = vrcp.pop %v87
    %v106 = vmul.f32 %v87, %v105
    %v107 = vsub.f32 1.0, %v106
    %v108 = vmul.f32 %v105, %v107
    %v109 = vadd.f32 %v105, %v108
    %vm110 = vweird.f32 %v87
    %vm111 = vweird.f32 %v105
    %vm112 = vmor %vm110, %vm111
    %v113 = vsel %vm112, %v105, %v109
    %v114 = vand.u32 2147483647, %v87
    %vm115 = vcmp.eq.f32.partialorder %v114, 8.507059e+37
    %v116 = vand.u32 %v87, 2147483648
    %v117 = vor.u32 1.1754944e-38, %v116
    %v118 = vsel %vm115, %v117, %v113
    %v119 = vmul.f32 1.0, %v118
    %v120 = vrcp.pop %v88
    %v121 = vmul.f32 %v88, %v120
    %v122 = vsub.f32 1.0, %v121
    %v123 = vmul.f32 %v120, %v122
    %v124 = vadd.f32 %v120, %v123
    %vm125 = vweird.f32 %v88
    %vm126 = vweird.f32 %v120
    %vm127 = vmor %vm125, %vm126
    %v128 = vsel %vm127, %v120, %v124
    %v129 = vand.u32 2147483647, %v88
    %vm130 = vcmp.eq.f32.partialorder %v129, 8.507059e+37
    %v131 = vand.u32 %v88, 2147483648
    %v132 = vor.u32 1.1754944e-38, %v131
    %v133 = vsel %vm130, %v132, %v128
    %v134 = vmul.f32 1.0, %v133
    %v135 = vrcp.pop %v89
    %v136 = vmul.f32 %v89, %v135
    %v137 = vsub.f32 1.0, %v136
    %v138 = vmul.f32 %v135, %v137
    %v139 = vadd.f32 %v135, %v138
    %vm140 = vweird.f32 %v89
    %vm141 = vweird.f32 %v135
    %vm142 = vmor %vm140, %vm141
    %v143 = vsel %vm142, %v135, %v139
    %v144 = vand.u32 2147483647, %v89
    %vm145 = vcmp.eq.f32.partialorder %v144, 8.507059e+37
    %v146 = vand.u32 %v89, 2147483648
    %v147 = vor.u32 1.1754944e-38, %v146
    %v148 = vsel %vm145, %v147, %v143
    %v149 = vmul.f32 1.0, %v148
    %v150 = vld [vmem:[%s3] sm:$0x1]
    %s151 = sld [smem:[#allocation2]]
    %v152 = vstv %s151
    %vm153 = vcmask 261120
    %v155 = vsel %vm153, %v150, 0
    %v158 = vsel %vm153, %v104, 0
    %v161 = vsel %vm153, %v119, 0
    %v164 = vsel %vm153, %v134, 0
    %v167 = vsel %vm153, %v149, 0
    %169 = vmatpush.xpose.msra.mxu0 0.0
    %170 = vmatpush.xpose.msra.mxu0 0.0
    %171 = vmatpush.xpose.msra.mxu0 0.0
    %172 = vmatpush.xpose.msra.mxu0 0.0
    %173 = vmatpush.xpose.msra.mxu0 0.0
    %174 = vmatpush.xpose.msra.mxu0 0.0
    %175 = vmatpush.xpose.msra.mxu0 0.0
    %176 = vmatpush.xpose.msra.mxu0 0.0
    %177 = vmatpush.xpose.msra.mxu0 0.0
    %178 = vmatpush.xpose.msra.mxu0 0.0
    %179 = vmatpush.xpose.msra.mxu0 0.0
    %180 = vmatpush.xpose.msra.mxu0 0.0
    %181 = vmatpush.xpose.msra.mxu0 %v167
    %182 = vmatpush.xpose.msra.mxu0 %v164
    %183 = vmatpush.xpose.msra.mxu0 %v161
    %184 = vmatpush.xpose.msra.mxu0 %v158
    %185 = vmatmul.f32.gmra.mxu0 %v155
    %v186 = vpop.f32.mrf.mxu0
    %v187 = vadd.f32 %v152, %v186
    %188 = vdwg.mxu0
    %v189 = vxor.u32 %v187, 2147483648
    %v190 = vmul.f32 %v189, 1.442695
    %v191 = vpow.pop %v190
    %v192 = vadd.f32 %v191, 1.0
    %v193 = vrcp.pop %v192
    %v194 = vmul.f32 %v192, %v193
    %v195 = vsub.f32 1.0, %v194
    %v196 = vmul.f32 %v193, %v195
    %v197 = vadd.f32 %v193, %v196
    %vm198 = vweird.f32 %v192
    %vm199 = vweird.f32 %v193
    %vm200 = vmor %vm198, %vm199
    %v201 = vsel %vm200, %v193, %v197
    %v202 = vand.u32 2147483647, %v192
    %vm203 = vcmp.eq.f32.partialorder %v202, 8.507059e+37
    %v204 = vand.u32 %v192, 2147483648
    %v205 = vor.u32 1.1754944e-38, %v204
    %v206 = vsel %vm203, %v205, %v201
    %v207 = vmul.f32 1.0, %v206
    %vm208 = vcmask 253952
    %209 = vst.msk [vmem:[#allocation3] sm:$0x1] %vm208, %v207
    // Predicated region
    $region22: #{tpu_custom_call.1} parent=1 // pred_check
      _
    $region23: #{tpu_custom_call.1} parent=1 // pred_check_branch
      %211 = sbr.rel (0) target = $region25
    $region24: #{tpu_custom_call.1} parent=1 // pred_region
      %213 = vsyncadd [#allocation4], 0
      %s215 = sshll.u32 [#allocation3], 4
      %s216 = int_to_ptr.vmem [resolvable:$true] %s215
      %s217 = sshll.u32 %s5, 4
      %s218 = int_to_ptr.hbm [resolvable:$true] %s217
      %220 = dma.vmem_to_hbm [thread:$0]  %s216, 16, %s218, [#allocation4]
    $region25: #{tpu_custom_call.1} parent=1 // pred_fallthru
      _
    // Predicated region
    $region26: #{tpu_custom_call.1} parent=1 // pred_check
      _
    $region27: #{tpu_custom_call.1} parent=1 // pred_check_branch
      %222 = sbr.rel (0) target = $region29
    $region28: #{tpu_custom_call.1} parent=1 // pred_region
      %224 = dma.done [#allocation4], 16
    $region29: #{tpu_custom_call.1} parent=1 // pred_fallthru
      _
    %225 = vsyncpa [#allocation4], 1

</llo_original>
